<compile_context>
chip_gen: v7x
topology: tpu7x:2x2x1
jax: 0.10.0
libtpu: 0.0.40
codegen_flags: <defaults>
</compile_context>

<pallas_src>
import jax
import jax.numpy as jnp
from jax import lax
from jax.experimental import pallas as pl
from jax.experimental.pallas import tpu as pltpu


_MIN_TILE = 8  # sublane granularity


def _attention_kernel(q_ref, v_ref, ctx_ref, attn_ref):
    # q_ref: (tq, H), v_ref: (Lv, H), ctx_ref: (tq, H), attn_ref: (tq, Lv)
    q = q_ref[...]
    v = v_ref[...]

    # attention_score = q @ v^T -> (tq, Lv).  Contract directly on H so the
    # MXU is fed without materializing a transposed copy of v.
    s = lax.dot_general(
        q, v,
        dimension_numbers=(((1,), (1,)), ((), ())),
        preferred_element_type=jnp.float32,
    )

    # Numerically stable softmax over the key axis.  Exact divide: the
    # attention distribution is a user-visible output that must sum to 1
    # (the approx EUP reciprocal caused the earlier tolerance failure).
    m = jnp.max(s, axis=-1, keepdims=True)
    e = jnp.exp(s - m)
    denom = jnp.sum(e, axis=-1, keepdims=True)
    p = e / denom                                      # (tq, Lv), f32

    # Cast p once; reuse the same cast for the PV matmul and (when dtypes
    # agree) the attention store -> a single VPU cast pass over (tq, Lv).
    p_cast = p.astype(v.dtype)
    ctx = jnp.dot(p_cast, v, preferred_element_type=jnp.float32)

    if attn_ref.dtype == p_cast.dtype:
        attn_ref[...] = p_cast
    else:
        attn_ref[...] = p.astype(attn_ref.dtype)
    ctx_ref[...] = ctx.astype(ctx_ref.dtype)


def _round_up(x, m):
    return (x + m - 1) // m * m


def _vmem_limits():
    """(vmem_limit_bytes to tell the compiler, per-step tile working-set budget)."""
    try:
        info = pltpu.get_tpu_info()
        cap = int(getattr(info, "vmem_capacity_bytes", 0)) or 64 * 1024 * 1024
    except Exception:
        cap = 64 * 1024 * 1024            # conservative (v7x-sized) default
    vmem_limit = (cap * 3) // 4           # 96 MiB on 128-MiB parts, 48 MiB on v7x
    tile_budget = (vmem_limit * 3) // 5   # headroom for Mosaic's internal temps
    return int(vmem_limit), int(tile_budget)


def _working_set_bytes(tq, Lv, H, in_bytes, ctx_bytes, attn_bytes):
    ws = 2 * tq * H * in_bytes            # double-buffered Q tile
    ws += 2 * Lv * H * in_bytes           # double-buffered resident V tile
    ws += 2 * tq * H * ctx_bytes          # double-buffered context out block
    ws += 2 * tq * Lv * attn_bytes        # double-buffered attention out block
    ws += 4 * tq * Lv * 4                 # f32 score / exp / prob temporaries
    ws += tq * H * 4                      # f32 context accumulator temp
    return ws


def _choose_q_tile(B, Lq, Lv, H, in_bytes, ctx_bytes, attn_bytes, budget):
    lq_min = _round_up(Lq, _MIN_TILE)
    # 256-multiples first (v6e/v7x 2x256 MXU), then 128 (v5e 4x128), then
    # smaller sublane-aligned tiles when VMEM (or Lq) is tight.
    for tq in (512, 256, 128, 64, 32, 16, 8):
        if tq > lq_min:
            continue
        waste = _round_up(Lq, tq) - Lq
        if tq > _MIN_TILE and waste * 4 > Lq:
            continue                      # >25% padded work -> smaller tile
        if B == 1 and tq > _MIN_TILE and _round_up(Lq, tq) // tq < 2:
            continue                      # keep both v7x TensorCores busy
        if _working_set_bytes(tq, Lv, H, in_bytes, ctx_bytes, attn_bytes) <= budget:
            return tq
    # Nothing fits the heuristic budget (huge Lv*H resident-V working set):
    # use the minimum tile and let the compiler-enforced vmem_limit_bytes
    # surface a real OOM instead of silently blowing VMEM.
    # TODO(synk): kv-tiled online-softmax path removes this Lv scaling.
    return _MIN_TILE


def dot_product_attention(query, value, *, attn_dtype=None, compute_dtype=None):
    """Pallas equivalent of DotProductAttention.forward(query, value).

    query: (B, Lq, H), value: (B, Lv, H)
    returns (context (B, Lq, H), attention_distribution (B, Lq, Lv))

    attn_dtype:    dtype of the returned attention matrix (default: query
                   dtype; bf16 halves the dominant (B, Lq, Lv) HBM writeback).
    compute_dtype: dtype fed to the MXU (default: input dtype; pass bf16 for
                   native MXU rate and half the Q/V DMA traffic — softmax
                   statistics stay f32 inside the kernel either way).
    """
    B, Lq, H = query.shape
    Bv, Lv, Hv = value.shape
    assert B == Bv and H == Hv, (query.shape, value.shape)

    out_dtype = query.dtype
    attn_dtype = jnp.dtype(out_dtype if attn_dtype is None else attn_dtype)
    if compute_dtype is not None:
        query = query.astype(compute_dtype)
        value = value.astype(compute_dtype)

    in_bytes = jnp.dtype(query.dtype).itemsize
    ctx_bytes = jnp.dtype(out_dtype).itemsize
    attn_bytes = attn_dtype.itemsize

    vmem_limit, tile_budget = _vmem_limits()
    tq = _choose_q_tile(B, Lq, Lv, H, in_bytes, ctx_bytes, attn_bytes, tile_budget)

    # Pad Lq up to a tile multiple (instead of an unchecked tq=Lq fallback);
    # padded rows compute a harmless uniform softmax and are sliced off.
    Lq_pad = _round_up(Lq, tq)
    if Lq_pad != Lq:
        query = jnp.pad(query, ((0, 0), (0, Lq_pad - Lq), (0, 0)))
    n_q = Lq_pad // tq

    grid_spec = pltpu.PrefetchScalarGridSpec(
        num_scalar_prefetch=0,
        grid=(B, n_q),
        in_specs=[
            # Q: one (tq, H) tile per (batch, q-tile) grid step.
            pl.BlockSpec((None, tq, H), lambda b, qi: (b, qi, 0)),
            # V: ignores the q-tile index so its (Lv, H) tile stays resident
            # across all q-tiles of a batch element.
            pl.BlockSpec((None, Lv, H), lambda b, qi: (b, 0, 0)),
        ],
        out_specs=[
            pl.BlockSpec((None, tq, H), lambda b, qi: (b, qi, 0)),
            pl.BlockSpec((None, tq, Lv), lambda b, qi: (b, qi, 0)),
        ],
    )

    out_shapes = (
        jax.ShapeDtypeStruct((B, Lq_pad, H), out_dtype),     # context
        jax.ShapeDtypeStruct((B, Lq_pad, Lv), attn_dtype),   # attention dist.
    )

    ctx, attn = pl.pallas_call(
        _attention_kernel,
        out_shape=out_shapes,
        grid_spec=grid_spec,
        compiler_params=pltpu.CompilerParams(
            dimension_semantics=("parallel", "parallel"),
            vmem_limit_bytes=vmem_limit,
        ),
    )(query, value)

    if Lq_pad != Lq:
        ctx = ctx[:, :Lq]
        attn = attn[:, :Lq]
    return ctx, attn


def _reference(query, value):
    # Pure-JAX reference mirroring the PyTorch forward exactly (no 1/sqrt(H)
    # scaling, same as the spec module).  HIGHEST precision so the reference
    # itself is not bf16-downgraded on TPU.
    s = jnp.einsum("bqh,bkh->bqk", query, value,
                   precision=lax.Precision.HIGHEST)
    p = jax.nn.softmax(s, axis=-1)
    ctx = jnp.einsum("bqk,bkh->bqh", p, value,
                     precision=lax.Precision.HIGHEST)
    return ctx, p


if __name__ == "__main__":
    key = jax.random.PRNGKey(0)

    # Case 1: shapes that tile exactly.
    B, Lq, Lv, H = 2, 8, 16, 32
    kq, kv = jax.random.split(key)
    query = jax.random.normal(kq, (B, Lq, H), dtype=jnp.float32)
    value = jax.random.normal(kv, (B, Lv, H), dtype=jnp.float32)

    ctx, attn = dot_product_attention(query, value)
    jax.block_until_ready((ctx, attn))
    ctx_ref, attn_ref = _reference(query, value)
    assert ctx.shape == (B, Lq, H) and attn.shape == (B, Lq, Lv)
    assert jnp.allclose(ctx, ctx_ref, atol=2e-3, rtol=2e-3)
    assert jnp.allclose(attn, attn_ref, atol=2e-3, rtol=2e-3)
    # exact softmax divide -> returned distribution rows sum to 1
    assert jnp.allclose(attn.sum(-1), 1.0, atol=1e-3)

    # Case 2: B=1 with a q length that needs padding (exercises the padded /
    # multi-q-tile path and the v7x two-TensorCore balance preference).
    B2, Lq2 = 1, 12
    kq2, kv2 = jax.random.split(kv)
    q2 = jax.random.normal(kq2, (B2, Lq2, H), dtype=jnp.float32)
    v2 = jax.random.normal(kv2, (B2, Lv, H), dtype=jnp.float32)
    ctx2, attn2 = dot_product_attention(q2, v2)
    jax.block_until_ready((ctx2, attn2))
    ctx2_ref, attn2_ref = _reference(q2, v2)
    assert ctx2.shape == (B2, Lq2, H) and attn2.shape == (B2, Lq2, Lv)
    assert jnp.allclose(ctx2, ctx2_ref, atol=2e-3, rtol=2e-3)
    assert jnp.allclose(attn2, attn2_ref, atol=2e-3, rtol=2e-3)

    # Case 3: bf16 MXU-operand path (native MXU rate), checked against the
    # reference on bf16-rounded inputs with a bf16-appropriate tolerance.
    ctx3, attn3 = dot_product_attention(query, value, compute_dtype=jnp.bfloat16)
    jax.block_until_ready((ctx3, attn3))
    ctx3_ref, _ = _reference(query.astype(jnp.bfloat16).astype(jnp.float32),
                             value.astype(jnp.bfloat16).astype(jnp.float32))
    assert jnp.allclose(ctx3, ctx3_ref, atol=5e-2, rtol=5e-2)

    print("KERNEL_OK")
</pallas_src>

<mosaic_0001>
module attributes {stable_mosaic.version = 11 : i64} {
  func.func @_attention_kernel(%arg0: i32, %arg1: i32, %arg2: memref<1x8x32xf32, #tpu.memory_space<vmem>>, %arg3: memref<1x16x32xf32, #tpu.memory_space<vmem>>, %arg4: memref<1x8x32xf32, #tpu.memory_space<vmem>>, %arg5: memref<1x8x16xf32, #tpu.memory_space<vmem>>) attributes {dimension_semantics = [#tpu.dimension_semantics<parallel>, #tpu.dimension_semantics<parallel>], iteration_bounds = array<i64: 2, 1>, scalar_prefetch = 0 : i64, scratch_operands = 0 : i64, tpu.core_type = #tpu.core_type<tc>, window_params = [{transform_indices = @transform_0, window_bounds = array<i64: 1, 8, 32>}, {transform_indices = @transform_1, window_bounds = array<i64: 1, 16, 32>}, {transform_indices = @transform_2, window_bounds = array<i64: 1, 8, 32>}, {transform_indices = @transform_3, window_bounds = array<i64: 1, 8, 16>}]} {
    %c0 = arith.constant 0 : index
    %c0_0 = arith.constant 0 : index
    %c0_1 = arith.constant 0 : index
    %0 = vector.load %arg2[%c0, %c0_0, %c0_1] : memref<1x8x32xf32, #tpu.memory_space<vmem>>, vector<1x8x32xf32>
    %1 = vector.shape_cast %0 : vector<1x8x32xf32> to vector<8x32xf32>
    %c0_2 = arith.constant 0 : index
    %c0_3 = arith.constant 0 : index
    %c0_4 = arith.constant 0 : index
    %2 = vector.load %arg3[%c0_2, %c0_3, %c0_4] : memref<1x16x32xf32, #tpu.memory_space<vmem>>, vector<1x16x32xf32>
    %3 = vector.shape_cast %2 : vector<1x16x32xf32> to vector<16x32xf32>
    %cst = arith.constant dense<0.000000e+00> : vector<8x16xf32>
    %4 = tpu.matmul %1, %3, %cst {dimension_numbers = #tpu.dot_dimension_numbers<[1], [1], [0], [0], [0, 0, 1, 0], [], []>} : vector<8x32xf32>, vector<16x32xf32>, vector<8x16xf32> -> vector<8x16xf32>
    %cst_5 = arith.constant dense<0xFF800000> : vector<8xf32>
    %5 = vector.multi_reduction <maximumf>, %4, %cst_5 [1] : vector<8x16xf32> to vector<8xf32>
    %6 = vector.shape_cast %5 : vector<8xf32> to vector<8x1xf32>
    %7 = vector.broadcast %6 : vector<8x1xf32> to vector<8x16xf32>
    %8 = arith.subf %4, %7 : vector<8x16xf32>
    %9 = math.exp %8 : vector<8x16xf32>
    %cst_6 = arith.constant dense<0.000000e+00> : vector<8xf32>
    %10 = vector.multi_reduction <add>, %9, %cst_6 [1] : vector<8x16xf32> to vector<8xf32>
    %11 = vector.shape_cast %10 : vector<8xf32> to vector<8x1xf32>
    %12 = vector.broadcast %11 : vector<8x1xf32> to vector<8x16xf32>
    %13 = arith.divf %9, %12 : vector<8x16xf32>
    %cst_7 = arith.constant dense<0.000000e+00> : vector<8x32xf32>
    %14 = tpu.matmul %13, %3, %cst_7 {dimension_numbers = #tpu.dot_dimension_numbers<[1], [0], [0], [1], [0, 0, 1, 1], [], []>} : vector<8x16xf32>, vector<16x32xf32>, vector<8x32xf32> -> vector<8x32xf32>
    %c0_8 = arith.constant 0 : index
    %c0_9 = arith.constant 0 : index
    %c0_10 = arith.constant 0 : index
    %15 = vector.load %arg5[%c0_8, %c0_9, %c0_10] : memref<1x8x16xf32, #tpu.memory_space<vmem>>, vector<1x8x16xf32>
    %16 = vector.shape_cast %15 : vector<1x8x16xf32> to vector<8x16xf32>
    %17 = vector.shape_cast %13 : vector<8x16xf32> to vector<1x8x16xf32>
    tpu.vector_store %arg5[%c0_8, %c0_9, %c0_10], %17 {strides = array<i32>} : memref<1x8x16xf32, #tpu.memory_space<vmem>>, vector<1x8x16xf32>,
    %c0_11 = arith.constant 0 : index
    %c0_12 = arith.constant 0 : index
    %c0_13 = arith.constant 0 : index
    %18 = vector.load %arg4[%c0_11, %c0_12, %c0_13] : memref<1x8x32xf32, #tpu.memory_space<vmem>>, vector<1x8x32xf32>
    %19 = vector.shape_cast %18 : vector<1x8x32xf32> to vector<8x32xf32>
    %20 = vector.shape_cast %14 : vector<8x32xf32> to vector<1x8x32xf32>
    tpu.vector_store %arg4[%c0_11, %c0_12, %c0_13], %20 {strides = array<i32>} : memref<1x8x32xf32, #tpu.memory_space<vmem>>, vector<1x8x32xf32>,
    return
  }
  func.func @transform_0(%arg0: i32, %arg1: i32) -> (i32, i32, i32) {
    %c0_i32 = arith.constant 0 : i32
    %c0_i32_0 = arith.constant 0 : i32
    return %arg0, %arg1, %c0_i32 : i32, i32, i32
  }
  func.func @transform_1(%arg0: i32, %arg1: i32) -> (i32, i32, i32) {
    %c0_i32 = arith.constant 0 : i32
    %c0_i32_0 = arith.constant 0 : i32
    %c0_i32_1 = arith.constant 0 : i32
    return %arg0, %c0_i32, %c0_i32_0 : i32, i32, i32
  }
  func.func @transform_2(%arg0: i32, %arg1: i32) -> (i32, i32, i32) {
    %c0_i32 = arith.constant 0 : i32
    %c0_i32_0 = arith.constant 0 : i32
    return %arg0, %arg1, %c0_i32 : i32, i32, i32
  }
  func.func @transform_3(%arg0: i32, %arg1: i32) -> (i32, i32, i32) {
    %c0_i32 = arith.constant 0 : i32
    %c0_i32_0 = arith.constant 0 : i32
    return %arg0, %arg1, %c0_i32 : i32, i32, i32
  }
}

</mosaic_0001>

<llo_original>
// kernel: tpu_custom_call.1
$region0: #{tpu_custom_call.1}
  #allocation0 [shape = 'u32[]', space=smem, size = 0x4, offset = 0x4, fixed_abs, tag = 'smem constant byte address 0x4 - core index']
  #allocation1 [shape = 'u32[144,128]{1,0:T(1,128)}', space=vmem, size = 0x12000, scoped, tag = 'internal scratch']
  %s0 = inlined_call_operand.hbm [shape: f32[2,8,32], index: 0, kind: input, shape index: {}]
  %s1 = inlined_call_operand.hbm [shape: f32[2,16,32], index: 1, kind: input, shape index: {}]
  %s2 = inlined_call_operand.hbm [shape: f32[2,8,32], index: 2, kind: output, shape index: {0}]
  %s3 = inlined_call_operand.hbm [shape: f32[2,8,16], index: 3, kind: output, shape index: {1}]
  %4 = xla_tuple %s2, %s3
  %s5 = sld [smem:[#allocation0]]
  $region57: #{tpu_custom_call.1} parent=0
    _
  %s7 = ssub.s32 1, %s5
  %s8 = scalar_select 0, %s7, %s5
  $region1: #{tpu_custom_call.1} parent=0
    #allocation2 [shape = 'u8[8192]{0}', space=vmem, size = 0x2000, scoped, tag = 'input window, operand 0']
    #allocation3 [shape = 's32[2]{0}', space=sflag, size = 0x8, scoped, tag = 'scoped memory for tpu_custom_call.1']
    #allocation4 [shape = 's32[2]{0}', space=sflag, size = 0x8, scoped, tag = 'scoped memory for tpu_custom_call.1']
    #allocation5 [shape = 'u8[16384]{0}', space=vmem, size = 0x4000, scoped, tag = 'input window, operand 1']
    #allocation6 [shape = 's32[2]{0}', space=sflag, size = 0x8, scoped, tag = 'scoped memory for tpu_custom_call.1']
    #allocation7 [shape = 'u8[8192]{0}', space=vmem, size = 0x2000, scoped, tag = 'output window, operand 0']
    #allocation8 [shape = 'u8[8192]{0}', space=vmem, size = 0x2000, scoped, tag = 'output window, operand 1']
    #allocation9 [shape = 's32[2]{0}', space=sflag, size = 0x8, scoped, tag = 'scoped memory for tpu_custom_call.1']
    %9 = vsyncpa [#allocation3], 0
    %s10 = scalar_lea.sflag [#allocation3], 1
    %11 = vsyncpa %s10, 0
    %12 = vsyncpa [#allocation6], 0
    %s13 = scalar_lea.sflag [#allocation6], 1
    %14 = vsyncpa %s13, 0
    %15 = vsyncpa [#allocation4], 0
    %s16 = scalar_lea.sflag [#allocation4], 1
    %17 = vsyncpa %s16, 0
    %18 = vsyncpa [#allocation9], 0
    %s19 = scalar_lea.sflag [#allocation9], 1
    %20 = vsyncpa %s19, 0
    loop: start=0, step=1, limit=4
    $region2: #{tpu_custom_call.1} parent=1 // loop_pre_header
      _
    $region3: #{tpu_custom_call.1} parent=1 // loop_header
      %s22 = sphi 0, %s26
      %p23 = scmp.ge.s32.totalorder %s22, 4
      %s29 = sphi 0, %s41
      %s30 = sphi 0, %s37
      %s31 = sphi 0, %s29
      %s32 = sphi 0, %s30
      %s33 = sphi 0, %s31
      %s34 = sphi 0, %s32
      %s46 = sphi 0, %s48
      %s49 = sphi 0, %s46
      %s50 = sphi 0, %s49
      %s66 = sphi 0, %s50
      %s72 = sphi 0, %s74
      %s75 = sphi 0, %s72
      %s76 = sphi 0, %s75
      %s92 = sphi 0, %s76
      %s100 = sphi 0, %s102
      %s103 = sphi 0, %s100
      %s104 = sphi 0, %s103
      %s120 = sphi 0, %s104
      %s128 = sphi 0, %s130
      %s131 = sphi 0, %s128
      %s132 = sphi 0, %s131
      %s148 = sphi 0, %s132
    $region4: #{tpu_custom_call.1} parent=1 // loop_header_branch
      %25 = sbr.rel (%p23) target = $region8
    $region5: #{tpu_custom_call.1} parent=1 // loop_body
      %s27 = ssub.s32 %s22, 1
      %s28 = ssub.s32 %s22, 2
      %s35 = sadd.s32 1, %s30
      %p36 = scmp.ge.s32.totalorder %s35, 1
      %s37 = scalar_select %p36, 0, %s35
      %s38 = sadd.s32 1, %s29
      %s39 = scalar_select %p36, %s38, %s29
      %p40 = scmp.ge.s32.totalorder %s39, 2
      %s41 = scalar_select %p40, 0, %s39
      %s42 = ssub.s32 %s29, %s41
      %s43 = ssub.s32 %s30, %s37
      %s44 = sor.u32 %s42, %s43
      %p45 = scmp.eq.s32.totalorder %s44, 0
      %s47 = sadd.s32 %s46, 1
      %s48 = scalar_select %p45, %s46, %s47
      %p51 = pneg %p45
      %p52 = scmp.eq.s32.totalorder %s22, 1
      %p53 = por %p51, %p52
      %p54 = scmp.ne.s32.totalorder %s46, %s49
      %p55 = scmp.eq.s32.totalorder %s22, 0
      %p56 = por %p54, %p55
      %p57 = scmp.ne.s32.totalorder %s46, %s49
      %p58 = scmp.eq.s32.totalorder %s27, 1
      %p59 = por %p57, %p58
      %p60 = scmp.ne.s32.totalorder %s49, %s50
      %p61 = scmp.eq.s32.totalorder %s27, 0
      %p62 = por %p60, %p61
      %p63 = scmp.ne.s32.totalorder %s49, %s50
      %p64 = scmp.eq.s32.totalorder %s28, 1
      %p65 = por %p63, %p64
      %p67 = scmp.ne.s32.totalorder %s50, %s66
      %p68 = scmp.eq.s32.totalorder %s28, 0
      %p69 = por %p67, %p68
      %s70 = ssub.s32 %s29, %s41
      %p71 = scmp.eq.s32.totalorder %s70, 0
      %s73 = sadd.s32 %s72, 1
      %s74 = scalar_select %p71, %s72, %s73
      %p77 = pneg %p71
      %p78 = scmp.eq.s32.totalorder %s22, 1
      %p79 = por %p77, %p78
      %p80 = scmp.ne.s32.totalorder %s72, %s75
      %p81 = scmp.eq.s32.totalorder %s22, 0
      %p82 = por %p80, %p81
      %p83 = scmp.ne.s32.totalorder %s72, %s75
      %p84 = scmp.eq.s32.totalorder %s27, 1
      %p85 = por %p83, %p84
      %p86 = scmp.ne.s32.totalorder %s75, %s76
      %p87 = scmp.eq.s32.totalorder %s27, 0
      %p88 = por %p86, %p87
      %p89 = scmp.ne.s32.totalorder %s75, %s76
      %p90 = scmp.eq.s32.totalorder %s28, 1
      %p91 = por %p89, %p90
      %p93 = scmp.ne.s32.totalorder %s76, %s92
      %p94 = scmp.eq.s32.totalorder %s28, 0
      %p95 = por %p93, %p94
      %s96 = ssub.s32 %s29, %s41
      %s97 = ssub.s32 %s30, %s37
      %s98 = sor.u32 %s96, %s97
      %p99 = scmp.eq.s32.totalorder %s98, 0
      %s101 = sadd.s32 %s100, 1
      %s102 = scalar_select %p99, %s100, %s101
      %p105 = pneg %p99
      %p106 = scmp.eq.s32.totalorder %s22, 1
      %p107 = por %p105, %p106
      %p108 = scmp.ne.s32.totalorder %s100, %s103
      %p109 = scmp.eq.s32.totalorder %s22, 0
      %p110 = por %p108, %p109
      %p111 = scmp.ne.s32.totalorder %s100, %s103
      %p112 = scmp.eq.s32.totalorder %s27, 1
      %p113 = por %p111, %p112
      %p114 = scmp.ne.s32.totalorder %s103, %s104
      %p115 = scmp.eq.s32.totalorder %s27, 0
      %p116 = por %p114, %p115
      %p117 = scmp.ne.s32.totalorder %s103, %s104
      %p118 = scmp.eq.s32.totalorder %s28, 1
      %p119 = por %p117, %p118
      %p121 = scmp.ne.s32.totalorder %s104, %s120
      %p122 = scmp.eq.s32.totalorder %s28, 0
      %p123 = por %p121, %p122
      %s124 = ssub.s32 %s29, %s41
      %s125 = ssub.s32 %s30, %s37
      %s126 = sor.u32 %s124, %s125
      %p127 = scmp.eq.s32.totalorder %s126, 0
      %s129 = sadd.s32 %s128, 1
      %s130 = scalar_select %p127, %s128, %s129
      %p133 = pneg %p127
      %p134 = scmp.eq.s32.totalorder %s22, 1
      %p135 = por %p133, %p134
      %p136 = scmp.ne.s32.totalorder %s128, %s131
      %p137 = scmp.eq.s32.totalorder %s22, 0
      %p138 = por %p136, %p137
      %p139 = scmp.ne.s32.totalorder %s128, %s131
      %p140 = scmp.eq.s32.totalorder %s27, 1
      %p141 = por %p139, %p140
      %p142 = scmp.ne.s32.totalorder %s131, %s132
      %p143 = scmp.eq.s32.totalorder %s27, 0
      %p144 = por %p142, %p143
      %p145 = scmp.ne.s32.totalorder %s131, %s132
      %p146 = scmp.eq.s32.totalorder %s28, 1
      %p147 = por %p145, %p146
      %p149 = scmp.ne.s32.totalorder %s132, %s148
      %p150 = scmp.eq.s32.totalorder %s28, 0
      %p151 = por %p149, %p150
      %p152 = scmp.le.s32.totalorder 1, %s22
      %p153 = scmp.lt.s32.totalorder %s22, 3
      %p154 = pnand %p152, %p153
      %p155 = pneg %p154
      // Predicated region
      $region9: #{tpu_custom_call.1} parent=5 // pred_check
        _
      $region10: #{tpu_custom_call.1} parent=5 // pred_check_branch
        %157 = sbr.rel (%p154) target = $region12
      $region11: #{tpu_custom_call.1} parent=5 // pred_region
        %s158 = ssub.s32 %s22, 1
      $region12: #{tpu_custom_call.1} parent=5 // pred_fallthru
        _
      %p159 = scmp.lt.s32.totalorder %s22, 2
      // Predicated region
      $region13: #{tpu_custom_call.1} parent=5 // pred_check
        %p160 = pneg %p159
      $region14: #{tpu_custom_call.1} parent=5 // pred_check_branch
        %162 = sbr.rel (%p160) target = $region16
      $region15: #{tpu_custom_call.1} parent=5 // pred_region
        // Predicated region
        $region17: #{tpu_custom_call.1} parent=15 // pred_check
          %p163 = pneg %p56
        $region18: #{tpu_custom_call.1} parent=15 // pred_check_branch
          %165 = sbr.rel (%p163) target = $region20
        $region19: #{tpu_custom_call.1} parent=15 // pred_region
          %s166 = sand.u32 %s46, 1
          %s167 = scalar_lea.sflag [#allocation3], %s166
          %s168 = sand.u32 %s46, 1
          %s169 = smul.addr %s168, 8
          %s170 = scalar_lea.vmem [#allocation2], %s169
          %s172 = ssub.s32 128, 128
          %173 = vsyncadd %s167, %s172
          %s174 = sadd.s32 %s30, %s29
          %s175 = smul.addr %s174, 128
          %s176 = scalar_lea.hbm %s0, %s175
          %s178 = sshll.u32 %s170, 4
          %s179 = int_to_ptr.vmem [resolvable:$true] %s178
          %181 = dma.hbm_to_vmem [thread:$0]  %s176, 128, %s179, %s167
        $region20: #{tpu_custom_call.1} parent=15 // pred_fallthru
          _
        // Predicated region
        $region21: #{tpu_custom_call.1} parent=15 // pred_check
          %p182 = pneg %p82
        $region22: #{tpu_custom_call.1} parent=15 // pred_check_branch
          %184 = sbr.rel (%p182) target = $region24
        $region23: #{tpu_custom_call.1} parent=15 // pred_region
          %s185 = sand.u32 %s72, 1
          %s186 = scalar_lea.sflag [#allocation6], %s185
          %s187 = sand.u32 %s72, 1
          %s188 = smul.addr %s187, 16
          %s189 = scalar_lea.vmem [#allocation5], %s188
          %s191 = ssub.s32 256, 256
          %192 = vsyncadd %s186, %s191
          %s193 = smul.addr %s29, 2
          %s194 = smul.addr %s193, 128
          %s195 = scalar_lea.hbm %s1, %s194
          %s196 = sshll.u32 %s189, 4
          %s197 = int_to_ptr.vmem [resolvable:$true] %s196
          %202 = dma.hbm_to_vmem [thread:$0]  %s195, 256, %s197, %s186, 128, 128, 8
        $region24: #{tpu_custom_call.1} parent=15 // pred_fallthru
          _
      $region16: #{tpu_custom_call.1} parent=5 // pred_fallthru
        _
      %p203 = scmp.le.s32.totalorder 1, %s22
      %p204 = scmp.lt.s32.totalorder %s22, 3
      %p205 = pnand %p203, %p204
      %p206 = pneg %p205
      // Predicated region
      $region25: #{tpu_custom_call.1} parent=5 // pred_check
        _
      $region26: #{tpu_custom_call.1} parent=5 // pred_check_branch
        %208 = sbr.rel (%p205) target = $region28
      $region27: #{tpu_custom_call.1} parent=5 // pred_region
        %s209 = ssub.s32 %s22, 1
        %s210 = sand.u32 %s49, 1
        %s211 = scalar_lea.sflag [#allocation3], %s210
        %s212 = sand.u32 %s49, 1
        %s213 = smul.addr %s212, 8
        %s214 = scalar_lea.vmem [#allocation2], %s213
        // Predicated region
        $region29: #{tpu_custom_call.1} parent=27 // pred_check
          %p215 = pneg %p62
        $region30: #{tpu_custom_call.1} parent=27 // pred_check_branch
          %217 = sbr.rel (%p215) target = $region32
        $region31: #{tpu_custom_call.1} parent=27 // pred_region
          %218 = dma.done %s211, 128
        $region32: #{tpu_custom_call.1} parent=27 // pred_fallthru
          _
        %s219 = sand.u32 %s75, 1
        %s220 = scalar_lea.sflag [#allocation6], %s219
        %s221 = sand.u32 %s75, 1
        %s222 = smul.addr %s221, 16
        %s223 = scalar_lea.vmem [#allocation5], %s222
        // Predicated region
        $region33: #{tpu_custom_call.1} parent=27 // pred_check
          %p224 = pneg %p88
        $region34: #{tpu_custom_call.1} parent=27 // pred_check_branch
          %226 = sbr.rel (%p224) target = $region36
        $region35: #{tpu_custom_call.1} parent=27 // pred_region
          %227 = dma.done %s220, 256
        $region36: #{tpu_custom_call.1} parent=27 // pred_fallthru
          _
        %s228 = sand.u32 %s49, 1
        %s229 = scalar_lea.sflag [#allocation3], %s228
        %s230 = sand.u32 %s49, 1
        %s231 = smul.addr %s230, 8
        %s232 = scalar_lea.vmem [#allocation2], %s231
        %p233 = pneg %p62
        %p234 = pneg %p59
        %s235 = sand.u32 %s75, 1
        %s236 = scalar_lea.sflag [#allocation6], %s235
        %s237 = sand.u32 %s75, 1
        %s238 = smul.addr %s237, 16
        %s239 = scalar_lea.vmem [#allocation5], %s238
        %p240 = pneg %p88
        %p241 = pneg %p85
        %p242 = pneg %p116
        %p243 = pneg %p113
        %s244 = sand.u32 %s103, 1
        %s245 = scalar_lea.sflag [#allocation4], %s244
        %s246 = sand.u32 %s103, 1
        %s247 = smul.addr %s246, 8
        %s248 = scalar_lea.vmem [#allocation7], %s247
        %p249 = pneg %p144
        %p250 = pneg %p141
        %s251 = sand.u32 %s131, 1
        %s252 = scalar_lea.sflag [#allocation9], %s251
        %s253 = sand.u32 %s131, 1
        %s254 = smul.addr %s253, 8
        %s255 = scalar_lea.vmem [#allocation8], %s254
        %v256 = vld [vmem:[%s214] sm:$0xff]
        %v257 = vld [vmem:[%s223] sm:$0xff]
        %v258 = vld [vmem:[%s223 + $0x8] sm:$0xff]
        %vm259 = vcmask 261120
        %v261 = vsel %vm259, %v256, 0
        %v264 = vsel %vm259, %v257, 0
        %v267 = vsel %vm259, %v258, 0
        %269 = vmatprep.subr.mxu0 0.0
        %270 = vmatpush1.xpose.msra.mxu0 %v264
        %271 = vmatprep.subr.mxu0 0.0
        %272 = vmatpush1.xpose.msra.mxu0 %v267
        %273 = vmatprep.subr.mxu0 0.0
        %274 = vmatpush1.xpose.msra.mxu0 0.0
        %275 = vmatprep.subr.mxu0 0.0
        %276 = vmatpush1.xpose.msra.mxu0 0.0
        %277 = vmatprep.subr.mxu0 0.0
        %278 = vmatpush1.xpose.msra.mxu0 0.0
        %279 = vmatprep.subr.mxu0 0.0
        %280 = vmatpush1.xpose.msra.mxu0 0.0
        %281 = vmatprep.subr.mxu0 0.0
        %282 = vmatpush1.xpose.msra.mxu0 0.0
        %283 = vmatprep.subr.mxu0 0.0
        %284 = vmatpush1.xpose.msra.mxu0 0.0
        %285 = vmatprep.subr.mxu0 0.0
        %286 = vmatpush1.xpose.msra.mxu0 0.0
        %287 = vmatprep.subr.mxu0 0.0
        %288 = vmatpush1.xpose.msra.mxu0 0.0
        %289 = vmatprep.subr.mxu0 0.0
        %290 = vmatpush1.xpose.msra.mxu0 0.0
        %291 = vmatprep.subr.mxu0 0.0
        %292 = vmatpush1.xpose.msra.mxu0 0.0
        %293 = vmatprep.subr.mxu0 0.0
        %294 = vmatpush1.xpose.msra.mxu0 0.0
        %295 = vmatprep.subr.mxu0 0.0
        %296 = vmatpush1.xpose.msra.mxu0 0.0
        %297 = vmatprep.subr.mxu0 0.0
        %298 = vmatpush1.xpose.msra.mxu0 0.0
        %299 = vmatprep.subr.mxu0 0.0
        %300 = vmatpush1.xpose.msra.mxu0 0.0
        %301 = vmatprep.subr.mxu0 0.0
        %302 = vmatpush1.xpose.msra.mxu0 0.0
        %303 = vmatprep.subr.mxu0 0.0
        %304 = vmatpush1.xpose.msra.mxu0 0.0
        %305 = vmatprep.subr.mxu0 0.0
        %306 = vmatpush1.xpose.msra.mxu0 0.0
        %307 = vmatprep.subr.mxu0 0.0
        %308 = vmatpush1.xpose.msra.mxu0 0.0
        %309 = vmatprep.subr.mxu0 0.0
        %310 = vmatpush1.xpose.msra.mxu0 0.0
        %311 = vmatprep.subr.mxu0 0.0
        %312 = vmatpush1.xpose.msra.mxu0 0.0
        %313 = vmatprep.subr.mxu0 0.0
        %314 = vmatpush1.xpose.msra.mxu0 0.0
        %315 = vmatprep.subr.mxu0 0.0
        %316 = vmatpush1.xpose.msra.mxu0 0.0
        %317 = vmatprep.subr.mxu0 0.0
        %318 = vmatpush1.xpose.msra.mxu0 0.0
        %319 = vmatprep.subr.mxu0 0.0
        %320 = vmatpush1.xpose.msra.mxu0 0.0
        %321 = vmatprep.subr.mxu0 0.0
        %322 = vmatpush1.xpose.msra.mxu0 0.0
        %323 = vmatprep.subr.mxu0 0.0
        %324 = vmatpush1.xpose.msra.mxu0 0.0
        %325 = vmatprep.subr.mxu0 0.0
        %326 = vmatpush1.xpose.msra.mxu0 0.0
        %327 = vmatprep.subr.mxu0 0.0
        %328 = vmatpush1.xpose.msra.mxu0 0.0
        %329 = vmatprep.subr.mxu0 0.0
        %330 = vmatpush1.xpose.msra.mxu0 0.0
        %331 = vmatprep.subr.mxu0 0.0
        %332 = vmatpush1.xpose.msra.mxu0 0.0
        %333 = vmatprep.mubr.f32.mxu0 0.0
        %334 = vmatmul.mubr.f32.gmra.mrb[0].mxu0 %v261
        %v335 = vpop.f32.mrb[0].mxu0
        %v336 = vadd.f32 0.0, %v335
        %v337 = vpop.f32.mrb[0].mxu0
        %338 = vdwg.mxu0
        %vm339 = vcmask 130048
        %v340 = vsel %vm339, %v336, -inf
        %341 = vmax.xlane.f32.xlu0 %v340
        %v342 = vpop.xlane.xlu0 %341
        %v343 = vsub.f32 %v336, %v342
        %v344 = vmul.f32 %v343, 1.442695
        %v345 = vpow.pop %v344
        %v346 = vsel %vm339, %v345, 0.0
        %347 = vadd.xlane.f32.xlu0 %v346
        %v348 = vpop.xlane.xlu0 %347
        %v349 = vrcp.pop %v348
        %v350 = vmul.f32 %v345, %v349
        %v352 = vsel %vm339, %v350, 0
        %354 = vmatprep.subr.mxu0 0.0
        %355 = vmatpush1.msra.mxu0 %v257
        %356 = vmatprep.subr.mxu0 0.0
        %357 = vmatpush1.msra.mxu0 %v258
        %358 = vmatprep.subr.mxu0 0.0
        %359 = vmatpush1.msra.mxu0 0.0
        %360 = vmatprep.subr.mxu0 0.0
        %361 = vmatpush1.msra.mxu0 0.0
        %362 = vmatprep.subr.mxu0 0.0
        %363 = vmatpush1.msra.mxu0 0.0
        %364 = vmatprep.subr.mxu0 0.0
        %365 = vmatpush1.msra.mxu0 0.0
        %366 = vmatprep.subr.mxu0 0.0
        %367 = vmatpush1.msra.mxu0 0.0
        %368 = vmatprep.subr.mxu0 0.0
        %369 = vmatpush1.msra.mxu0 0.0
        %370 = vmatprep.subr.mxu0 0.0
        %371 = vmatpush1.msra.mxu0 0.0
        %372 = vmatprep.subr.mxu0 0.0
        %373 = vmatpush1.msra.mxu0 0.0
        %374 = vmatprep.subr.mxu0 0.0
        %375 = vmatpush1.msra.mxu0 0.0
        %376 = vmatprep.subr.mxu0 0.0
        %377 = vmatpush1.msra.mxu0 0.0
        %378 = vmatprep.subr.mxu0 0.0
        %379 = vmatpush1.msra.mxu0 0.0
        %380 = vmatprep.subr.mxu0 0.0
        %381 = vmatpush1.msra.mxu0 0.0
        %382 = vmatprep.subr.mxu0 0.0
        %383 = vmatpush1.msra.mxu0 0.0
        %384 = vmatprep.subr.mxu0 0.0
        %385 = vmatpush1.msra.mxu0 0.0
        %386 = vmatprep.subr.mxu0 0.0
        %387 = vmatpush1.msra.mxu0 0.0
        %388 = vmatprep.subr.mxu0 0.0
        %389 = vmatpush1.msra.mxu0 0.0
        %390 = vmatprep.subr.mxu0 0.0
        %391 = vmatpush1.msra.mxu0 0.0
        %392 = vmatprep.subr.mxu0 0.0
        %393 = vmatpush1.msra.mxu0 0.0
        %394 = vmatprep.subr.mxu0 0.0
        %395 = vmatpush1.msra.mxu0 0.0
        %396 = vmatprep.subr.mxu0 0.0
        %397 = vmatpush1.msra.mxu0 0.0
        %398 = vmatprep.subr.mxu0 0.0
        %399 = vmatpush1.msra.mxu0 0.0
        %400 = vmatprep.subr.mxu0 0.0
        %401 = vmatpush1.msra.mxu0 0.0
        %402 = vmatprep.subr.mxu0 0.0
        %403 = vmatpush1.msra.mxu0 0.0
        %404 = vmatprep.subr.mxu0 0.0
        %405 = vmatpush1.msra.mxu0 0.0
        %406 = vmatprep.subr.mxu0 0.0
        %407 = vmatpush1.msra.mxu0 0.0
        %408 = vmatprep.subr.mxu0 0.0
        %409 = vmatpush1.msra.mxu0 0.0
        %410 = vmatprep.subr.mxu0 0.0
        %411 = vmatpush1.msra.mxu0 0.0
        %412 = vmatprep.subr.mxu0 0.0
        %413 = vmatpush1.msra.mxu0 0.0
        %414 = vmatprep.subr.mxu0 0.0
        %415 = vmatpush1.msra.mxu0 0.0
        %416 = vmatprep.subr.mxu0 0.0
        %417 = vmatpush1.msra.mxu0 0.0
        %418 = vmatprep.mubr.f32.mxu0 0.0
        %419 = vmatmul.mubr.f32.gmra.mrb[0].mxu0 %v352
        %v420 = vpop.f32.mrb[0].mxu0
        %v421 = vadd.f32 0.0, %v420
        %v422 = vpop.f32.mrb[0].mxu0
        %423 = vdwg.mxu0
        %424 = vst.msk [vmem:[%s255] sm:$0xff] %vm339, %v350
        %425 = vst.msk [vmem:[%s248] sm:$0xff] %vm259, %v421
        %s426 = sand.u32 %s103, 1
        %s427 = scalar_lea.sflag [#allocation4], %s426
        %s428 = sand.u32 %s103, 1
        %s429 = smul.addr %s428, 8
        %s430 = scalar_lea.vmem [#allocation7], %s429
        %s431 = sand.u32 %s131, 1
        %s432 = scalar_lea.sflag [#allocation9], %s431
        %s433 = sand.u32 %s131, 1
        %s434 = smul.addr %s433, 8
        %s435 = scalar_lea.vmem [#allocation8], %s434
        // Predicated region
        $region37: #{tpu_custom_call.1} parent=27 // pred_check
          %p436 = pneg %p113
        $region38: #{tpu_custom_call.1} parent=27 // pred_check_branch
          %438 = sbr.rel (%p436) target = $region40
        $region39: #{tpu_custom_call.1} parent=27 // pred_region
          %s440 = ssub.s32 128, 128
          %441 = vsyncadd %s427, %s440
          %s442 = sadd.s32 %s32, %s31
          %s443 = smul.addr %s442, 128
          %s444 = scalar_lea.hbm %s2, %s443
          %s446 = sshll.u32 %s430, 4
          %s447 = int_to_ptr.vmem [resolvable:$true] %s446
          %449 = dma.vmem_to_hbm [thread:$0]  %s447, 128, %s444, %s427
        $region40: #{tpu_custom_call.1} parent=27 // pred_fallthru
          _
        // Predicated region
        $region41: #{tpu_custom_call.1} parent=27 // pred_check
          %p450 = pneg %p141
        $region42: #{tpu_custom_call.1} parent=27 // pred_check_branch
          %452 = sbr.rel (%p450) target = $region44
        $region43: #{tpu_custom_call.1} parent=27 // pred_region
          %s454 = ssub.s32 128, 128
          %455 = vsyncadd %s432, %s454
          %s456 = sadd.s32 %s32, %s31
          %s457 = smul.addr %s456, 128
          %s458 = scalar_lea.hbm %s3, %s457
          %s460 = sshll.u32 %s435, 4
          %s461 = int_to_ptr.vmem [resolvable:$true] %s460
          %463 = dma.vmem_to_hbm [thread:$0]  %s461, 128, %s458, %s432
        $region44: #{tpu_custom_call.1} parent=27 // pred_fallthru
          _
      $region28: #{tpu_custom_call.1} parent=5 // pred_fallthru
        _
      %p464 = scmp.le.s32.totalorder 2, %s22
      // Predicated region
      $region45: #{tpu_custom_call.1} parent=5 // pred_check
        %p465 = pneg %p464
      $region46: #{tpu_custom_call.1} parent=5 // pred_check_branch
        %467 = sbr.rel (%p465) target = $region48
      $region47: #{tpu_custom_call.1} parent=5 // pred_region
        %s468 = ssub.s32 %s22, 2
        // Predicated region
        $region49: #{tpu_custom_call.1} parent=47 // pred_check
          %p469 = pneg %p119
        $region50: #{tpu_custom_call.1} parent=47 // pred_check_branch
          %471 = sbr.rel (%p469) target = $region52
        $region51: #{tpu_custom_call.1} parent=47 // pred_region
          %s472 = sand.u32 %s104, 1
          %s473 = scalar_lea.sflag [#allocation4], %s472
          %s474 = sand.u32 %s104, 1
          %s475 = smul.addr %s474, 8
          %s476 = scalar_lea.vmem [#allocation7], %s475
          %477 = dma.done %s473, 128
        $region52: #{tpu_custom_call.1} parent=47 // pred_fallthru
          _
        // Predicated region
        $region53: #{tpu_custom_call.1} parent=47 // pred_check
          %p478 = pneg %p147
        $region54: #{tpu_custom_call.1} parent=47 // pred_check_branch
          %480 = sbr.rel (%p478) target = $region56
        $region55: #{tpu_custom_call.1} parent=47 // pred_region
          %s481 = sand.u32 %s132, 1
          %s482 = scalar_lea.sflag [#allocation9], %s481
          %s483 = sand.u32 %s132, 1
          %s484 = smul.addr %s483, 8
          %s485 = scalar_lea.vmem [#allocation8], %s484
          %486 = dma.done %s482, 128
        $region56: #{tpu_custom_call.1} parent=47 // pred_fallthru
          _
      $region48: #{tpu_custom_call.1} parent=5 // pred_fallthru
        _
    $region6: #{tpu_custom_call.1} parent=1 // loop_footer
      %s26 = sadd.s32 1, %s22
    $region7: #{tpu_custom_call.1} parent=1 // loop_footer_branch
      %21 = sbr.rel target = $region3
    $region8: #{tpu_custom_call.1} parent=1 // loop_exit
      _
    %487 = vsyncpa [#allocation3], 1
    %s488 = scalar_lea.sflag [#allocation3], 1
    %489 = vsyncpa %s488, 1
    %490 = vsyncpa [#allocation6], 1
    %s491 = scalar_lea.sflag [#allocation6], 1
    %492 = vsyncpa %s491, 1
    %493 = vsyncpa [#allocation4], 1
    %s494 = scalar_lea.sflag [#allocation4], 1
    %495 = vsyncpa %s494, 1
    %496 = vsyncpa [#allocation9], 1
    %s497 = scalar_lea.sflag [#allocation9], 1
    %498 = vsyncpa %s497, 1

</llo_original>
